<compile_context>
chip_gen: v6e
topology: v6e:2x2x1
jax: 0.10.0
libtpu: 0.0.40
codegen_flags: <defaults>
</compile_context>

<pallas_src>
import functools

import jax
import jax.numpy as jnp
from jax import lax
from jax.experimental import pallas as pl
from jax.experimental.pallas import tpu as pltpu


# Route the softmax denominator through the EUP approx reciprocal (recommended
# on v5e: relieves the single store slot region; ~1e-4 relative error).
APPROX_SOFTMAX_RECIPROCAL = False


def _round_up(x, m):
    return ((x + m - 1) // m) * m


def _pick_tile(dim, cap):
    """Largest 128-aligned tile <= cap that divides `dim` exactly.

    If dim <= cap the full extent is used (always legal).  If nothing
    128-aligned divides, fall back to the full extent (no padding ever)."""
    if dim <= cap:
        return dim
    t = (cap // 128) * 128
    while t >= 128:
        if dim % t == 0:
            return t
        t -= 128
    return dim


# ----------------------------------------------------------------------------
# Kernel 1/2: tiled dense layer  y = x @ W (+ b)
#   grid = (M/tm, N/tn, K/tk); f32 accumulator scratch only when K is split.
# ----------------------------------------------------------------------------
def _matmul_kernel(*refs, nsteps_k, has_bias):
    if nsteps_k == 1:
        # Single K step: write the output directly, no accumulator round trip.
        if has_bias:
            x_ref, w_ref, b_ref, o_ref = refs
        else:
            x_ref, w_ref, o_ref = refs
            b_ref = None
        acc = jnp.dot(x_ref[...], w_ref[...], preferred_element_type=jnp.float32)
        if b_ref is not None:
            acc = acc + b_ref[...].astype(jnp.float32)
        o_ref[...] = acc.astype(o_ref.dtype)
        return

    if has_bias:
        x_ref, w_ref, b_ref, o_ref, acc_ref = refs
    else:
        x_ref, w_ref, o_ref, acc_ref = refs
        b_ref = None

    @pl.when(pl.program_id(2) == 0)
    def _():
        acc_ref[...] = jnp.zeros_like(acc_ref)

    acc_ref[...] += jnp.dot(x_ref[...], w_ref[...],
                            preferred_element_type=jnp.float32)

    @pl.when(pl.program_id(2) == nsteps_k - 1)
    def _():
        out = acc_ref[...]
        if b_ref is not None:
            out = out + b_ref[...].astype(jnp.float32)
        o_ref[...] = out.astype(o_ref.dtype)


def pallas_linear(x2d, w, b=None, *, tm=512, tn=512, tk_cap=512, k_single_max=1024):
    """x2d: (M, K), w: (K, N) stored as (in, out), b: (N,) or None.

    Caller guarantees M is sublane-friendly (attention_forward pads tokens to
    a multiple of 128 once).  Tiles are chosen to divide the dims exactly, so
    there is no padding, no output slicing, and no wasted MXU work."""
    M, K = x2d.shape
    Kw, N = w.shape
    assert K == Kw
    out_dtype = x2d.dtype

    tm = _pick_tile(M, tm)
    tn = _pick_tile(N, tn)
    tk = K if K <= k_single_max else _pick_tile(K, tk_cap)
    nk = K // tk

    has_bias = b is not None
    in_specs = [
        pl.BlockSpec((tm, tk), lambda i, j, k: (i, k)),
        pl.BlockSpec((tk, tn), lambda i, j, k: (k, j)),
    ]
    args = [x2d, w]
    if has_bias:
        in_specs.append(pl.BlockSpec((1, tn), lambda i, j, k: (0, j)))
        args.append(b.reshape(1, N))

    kern = functools.partial(_matmul_kernel, nsteps_k=nk, has_bias=has_bias)
    scratch = [] if nk == 1 else [pltpu.VMEM((tm, tn), jnp.float32)]

    return pl.pallas_call(
        kern,
        out_shape=jax.ShapeDtypeStruct((M, N), out_dtype),
        grid=(M // tm, N // tn, nk),
        in_specs=in_specs,
        out_specs=pl.BlockSpec((tm, tn), lambda i, j, k: (i, j)),
        scratch_shapes=scratch,
        compiler_params=pltpu.CompilerParams(
            dimension_semantics=("parallel", "parallel", "arbitrary")),
    )(*args)


# ----------------------------------------------------------------------------
# Kernel 2/2: fused multi-head attention core.
#   grid = (B, Np/tq): batch x query-tile (two parallel axes -> both v7x TCs).
#   inputs : q third (1, tq, C), k third (1, Np, C), v third (1, Np, C)
#            (three channel-block views of the same qkv slab; q is pre-scaled
#             because the scale is folded into w_qkv at param prep).
#   outputs: lane-dense (1, tq, C) context slab [+ optional (1,H,tq,Np) probs].
# ----------------------------------------------------------------------------
def _attn_kernel(q_ref, k_ref, v_ref, *rest, num_heads, head_dim, valid_n,
                 with_attn, approx_recip):
    if with_attn:
        o_ref, attn_ref, ctx_acc = rest
    else:
        (o_ref, ctx_acc), attn_ref = rest, None

    q_all = q_ref[0]            # (tq, C)   pre-scaled q
    k_all = k_ref[0]            # (Np, C)
    v_all = v_ref[0]            # (Np, C)
    tq = q_all.shape[0]
    Np = k_all.shape[0]

    if valid_n < Np:
        key_mask = lax.broadcasted_iota(jnp.int32, (tq, Np), 1) < valid_n

    for h in range(num_heads):                       # static unroll over heads
        lo = h * head_dim
        hi = lo + head_dim
        q = q_all[:, lo:hi]
        k = k_all[:, lo:hi]
        v = v_all[:, lo:hi]

        # scores = q @ k^T  -> (tq, Np), f32 accumulation on the MXU
        s = lax.dot_general(q, k, (((1,), (1,)), ((), ())),
                            preferred_element_type=jnp.float32)
        if valid_n < Np:
            s = jnp.where(key_mask, s, -1e30)        # mask padded key tokens

        # numerically-stable softmax in f32; divide via (approx) reciprocal
        s = s - jnp.max(s, axis=-1, keepdims=True)
        e = jnp.exp(s)
        denom = jnp.sum(e, axis=-1, keepdims=True)
        p = e * pl.reciprocal(denom, approx=approx_recip)

        if with_attn:
            attn_ref[0, h] = p.astype(attn_ref.dtype)

        # accumulate this head's context into the shared f32 scratch (bounds
        # per-head liveness instead of keeping every head output for a concat)
        ctx_acc[:, lo:hi] = jnp.dot(p.astype(v.dtype), v,
                                    preferred_element_type=jnp.float32)

    # one lane-dense (tq, C) cast + store
    o_ref[0] = ctx_acc[...].astype(o_ref.dtype)


def pallas_attention(qkv, num_heads, *, valid_n, with_attn=True,
                     attn_dtype=jnp.float32, tq=128,
                     approx_recip=APPROX_SOFTMAX_RECIPROCAL):
    """qkv: (B, Np, 3C) with Np already lane-aligned (multiple of 128) and the
    q third pre-scaled.  Returns (ctx (B,Np,C), attn (B,H,Np,Np) or None)."""
    B, Np, C3 = qkv.shape
    C = C3 // 3
    Dh = C // num_heads
    tq = min(tq, Np)
    assert Np % tq == 0
    nq = Np // tq

    kern = functools.partial(
        _attn_kernel, num_heads=num_heads, head_dim=Dh, valid_n=valid_n,
        with_attn=with_attn, approx_recip=approx_recip)

    in_specs = [
        pl.BlockSpec((1, tq, C), lambda b, qi: (b, qi, 0)),   # q third (query tile)
        pl.BlockSpec((1, Np, C), lambda b, qi: (b, 0, 1)),    # k third (all keys)
        pl.BlockSpec((1, Np, C), lambda b, qi: (b, 0, 2)),    # v third (all keys)
    ]

    if with_attn:
        out_shape = (
            jax.ShapeDtypeStruct((B, Np, C), qkv.dtype),
            jax.ShapeDtypeStruct((B, num_heads, Np, Np), attn_dtype),
        )
        out_specs = (
            pl.BlockSpec((1, tq, C), lambda b, qi: (b, qi, 0)),
            pl.BlockSpec((1, num_heads, tq, Np), lambda b, qi: (b, 0, qi, 0)),
        )
    else:
        out_shape = jax.ShapeDtypeStruct((B, Np, C), qkv.dtype)
        out_specs = pl.BlockSpec((1, tq, C), lambda b, qi: (b, qi, 0))

    result = pl.pallas_call(
        kern,
        out_shape=out_shape,
        grid=(B, nq),
        in_specs=in_specs,
        out_specs=out_specs,
        scratch_shapes=[pltpu.VMEM((tq, C), jnp.float32)],
        compiler_params=pltpu.CompilerParams(
            dimension_semantics=("parallel", "parallel")),
    )(qkv, qkv, qkv)

    if with_attn:
        return result[0], result[1]
    return result, None


# ----------------------------------------------------------------------------
# Parameter prep (done once): fold 1/sqrt(Dh) into the q-third of w_qkv.
# ----------------------------------------------------------------------------
def prepare_params(raw_params, num_heads):
    w_qkv = raw_params["w_qkv"]
    C = w_qkv.shape[0]
    Dh = C // num_heads
    scale = Dh ** (-0.5)
    w_qkv = w_qkv.at[:, :C].multiply(scale)
    return {"w_qkv": w_qkv,
            "w_proj": raw_params["w_proj"],
            "b_proj": raw_params["b_proj"]}


# ----------------------------------------------------------------------------
# Full Attention-module forward.  Tokens padded ONCE here; everything below
# runs on the padded shapes; one slice at the very end.
# ----------------------------------------------------------------------------
def attention_forward(x, params, num_heads, *, with_attn=True,
                      attn_dtype=jnp.float32):
    B, N, C = x.shape
    Np = _round_up(N, 128)               # lane-aligned token count
    if Np != N:
        x = jnp.pad(x, ((0, 0), (0, Np - N), (0, 0)))

    x2d = x.reshape(B * Np, C)

    # qkv projection (qkv_bias=False -> no bias); scale already folded into W
    qkv = pallas_linear(x2d, params["w_qkv"], None)           # (B*Np, 3C)
    qkv = qkv.reshape(B, Np, 3 * C)                           # free reshape

    ctx, attn = pallas_attention(qkv, num_heads, valid_n=N,
                                 with_attn=with_attn, attn_dtype=attn_dtype)

    # output projection (with bias)
    y = pallas_linear(ctx.reshape(B * Np, C), params["w_proj"], params["b_proj"])
    y = y.reshape(B, Np, C)

    if Np != N:
        y = y[:, :N, :]
        if attn is not None:
            attn = attn[:, :, :N, :N]

    # attn_drop / proj_drop have p=0.0 -> identity
    return y, attn


# ----------------------------------------------------------------------------
# Pure-JAX reference (takes the RAW, unscaled parameters)
# ----------------------------------------------------------------------------
def attention_reference(x, raw_params, num_heads):
    B, N, C = x.shape
    Dh = C // num_heads
    scale = Dh ** (-0.5)
    qkv = (x @ raw_params["w_qkv"]).reshape(B, N, 3, num_heads, Dh)
    qkv = qkv.transpose(2, 0, 3, 1, 4)
    q, k, v = qkv[0], qkv[1], qkv[2]
    attn = jax.nn.softmax(jnp.einsum("bhnd,bhmd->bhnm", q, k) * scale, axis=-1)
    out = jnp.einsum("bhnm,bhmd->bhnd", attn, v).transpose(0, 2, 1, 3)
    out = out.reshape(B, N, C)
    y = out @ raw_params["w_proj"] + raw_params["b_proj"]
    return y, attn


if __name__ == "__main__":
    # Small shapes consistent with the module: B=2, N=8 tokens, C=128, 8 heads
    # (Dh=16).  C chosen lane-aligned so every block is (8,128)-friendly.
    B, N, C = 2, 8, 128
    num_heads = 8

    key = jax.random.PRNGKey(0)
    k_x, k_qkv, k_proj_w, k_proj_b = jax.random.split(key, 4)

    x = jax.random.normal(k_x, (B, N, C), dtype=jnp.float32)

    # Weights stored as (in, out) so forward is x @ W; qkv_bias=False.
    raw_params = {
        "w_qkv": 0.05 * jax.random.normal(k_qkv, (C, 3 * C), dtype=jnp.float32),
        "w_proj": 0.05 * jax.random.normal(k_proj_w, (C, C), dtype=jnp.float32),
        "b_proj": 0.05 * jax.random.normal(k_proj_b, (C,), dtype=jnp.float32),
    }
    params = prepare_params(raw_params, num_heads)

    y, attn = attention_forward(x, params, num_heads)
    y, attn = jax.block_until_ready((y, attn))

    y_ref, attn_ref = attention_reference(x, raw_params, num_heads)

    assert y.shape == (B, N, C)
    assert attn.shape == (B, num_heads, N, N)
    assert jnp.allclose(y, y_ref, atol=1e-4, rtol=1e-4), \
        float(jnp.max(jnp.abs(y - y_ref)))
    assert jnp.allclose(attn, attn_ref, atol=1e-5, rtol=1e-5), \
        float(jnp.max(jnp.abs(attn - attn_ref)))

    # Also exercise the cheaper no-attn-probs path (drops the biggest DMA).
    y2, attn2 = attention_forward(x, params, num_heads, with_attn=False)
    y2 = jax.block_until_ready(y2)
    assert attn2 is None
    assert jnp.allclose(y2, y_ref, atol=1e-4, rtol=1e-4)

    print("KERNEL_OK")
</pallas_src>

<mosaic_0001>
module attributes {stable_mosaic.version = 11 : i64} {
  func.func @_matmul_kernel(%arg0: i32, %arg1: i32, %arg2: i32, %arg3: memref<256x128xf32, #tpu.memory_space<vmem>>, %arg4: memref<128x384xf32, #tpu.memory_space<vmem>>, %arg5: memref<256x384xf32, #tpu.memory_space<vmem>>) attributes {dimension_semantics = [#tpu.dimension_semantics<parallel>, #tpu.dimension_semantics<parallel>, #tpu.dimension_semantics<arbitrary>], iteration_bounds = array<i64: 1, 1, 1>, scalar_prefetch = 0 : i64, scratch_operands = 0 : i64, tpu.core_type = #tpu.core_type<tc>, window_params = [{transform_indices = @transform_0, window_bounds = array<i64: 256, 128>}, {transform_indices = @transform_1, window_bounds = array<i64: 128, 384>}, {transform_indices = @transform_2, window_bounds = array<i64: 256, 384>}]} {
    %c0 = arith.constant 0 : index
    %c0_0 = arith.constant 0 : index
    %0 = vector.load %arg3[%c0, %c0_0] : memref<256x128xf32, #tpu.memory_space<vmem>>, vector<256x128xf32>
    %c0_1 = arith.constant 0 : index
    %c0_2 = arith.constant 0 : index
    %1 = vector.load %arg4[%c0_1, %c0_2] : memref<128x384xf32, #tpu.memory_space<vmem>>, vector<128x384xf32>
    %cst = arith.constant dense<0.000000e+00> : vector<256x384xf32>
    %2 = tpu.matmul %0, %1, %cst {dimension_numbers = #tpu.dot_dimension_numbers<[1], [0], [0], [1], [0, 0, 1, 1], [], []>} : vector<256x128xf32>, vector<128x384xf32>, vector<256x384xf32> -> vector<256x384xf32>
    %c0_3 = arith.constant 0 : index
    %c0_4 = arith.constant 0 : index
    %3 = vector.load %arg5[%c0_3, %c0_4] : memref<256x384xf32, #tpu.memory_space<vmem>>, vector<256x384xf32>
    tpu.vector_store %arg5[%c0_3, %c0_4], %2 {strides = array<i32>} : memref<256x384xf32, #tpu.memory_space<vmem>>, vector<256x384xf32>,
    return
  }
  func.func @transform_0(%arg0: i32, %arg1: i32, %arg2: i32) -> (i32, i32) {
    %c0_i32 = arith.constant 0 : i32
    return %arg0, %arg2 : i32, i32
  }
  func.func @transform_1(%arg0: i32, %arg1: i32, %arg2: i32) -> (i32, i32) {
    %c0_i32 = arith.constant 0 : i32
    return %arg2, %arg1 : i32, i32
  }
  func.func @transform_2(%arg0: i32, %arg1: i32, %arg2: i32) -> (i32, i32) {
    %c0_i32 = arith.constant 0 : i32
    return %arg0, %arg1 : i32, i32
  }
}

</mosaic_0001>

<llo_original>
// kernel: tpu_custom_call.1
$region0: #{tpu_custom_call.1}
  #allocation0 [shape = 'u32[]', space=smem, size = 0x4, offset = 0x4, fixed_abs, tag = 'smem constant byte address 0x4 - core index']
  #allocation1 [shape = 'u32[144,128]{1,0:T(1,128)}', space=vmem, size = 0x12000, scoped, tag = 'internal scratch']
  %s0 = inlined_call_operand.hbm [shape: f32[256,128], index: 0, kind: input, shape index: {}]
  %s1 = inlined_call_operand.hbm [shape: f32[128,384], index: 1, kind: input, shape index: {}]
  %s2 = inlined_call_operand.hbm [shape: f32[256,384], index: 2, kind: output, shape index: {}]
  %s3 = sld [smem:[#allocation0]]
  $region26: #{tpu_custom_call.1} parent=0
    _
  %s5 = ssub.s32 1, %s3
  %s6 = scalar_select 0, %s5, %s3
  $region1: #{tpu_custom_call.1} parent=0
    #allocation2 [shape = 'u8[131072]{0}', space=vmem, size = 0x20000, scoped, tag = 'input window, operand 0, single buffered']
    #allocation3 [shape = 's32[1]{0}', space=sflag, size = 0x4, scoped, tag = 'scoped memory for tpu_custom_call.1']
    #allocation4 [shape = 's32[1]{0}', space=sflag, size = 0x4, scoped, tag = 'scoped memory for tpu_custom_call.1']
    #allocation5 [shape = 'u8[196608]{0}', space=vmem, size = 0x30000, scoped, tag = 'input window, operand 1, single buffered']
    #allocation6 [shape = 's32[1]{0}', space=sflag, size = 0x4, scoped, tag = 'scoped memory for tpu_custom_call.1']
    #allocation7 [shape = 'u8[393216]{0}', space=vmem, size = 0x60000, scoped, tag = 'output window, operand 0, single buffered']
    %7 = vsyncpa [#allocation3], 0
    %8 = vsyncpa [#allocation6], 0
    %9 = vsyncpa [#allocation4], 0
    // Predicated region
    $region2: #{tpu_custom_call.1} parent=1 // pred_check
      _
    $region3: #{tpu_custom_call.1} parent=1 // pred_check_branch
      %11 = sbr.rel (0) target = $region5
    $region4: #{tpu_custom_call.1} parent=1 // pred_region
      %s13 = ssub.s32 4096, 4096
      %14 = vsyncadd [#allocation3], %s13
      %s15 = sshll.u32 [#allocation2], 4
      %s16 = int_to_ptr.vmem [resolvable:$true] %s15
      %21 = dma.hbm_to_vmem [thread:$0]  %s0, 4096, %s16, [#allocation3], 128, 128, 8
    $region5: #{tpu_custom_call.1} parent=1 // pred_fallthru
      _
    // Predicated region
    $region6: #{tpu_custom_call.1} parent=1 // pred_check
      _
    $region7: #{tpu_custom_call.1} parent=1 // pred_check_branch
      %23 = sbr.rel (0) target = $region9
    $region8: #{tpu_custom_call.1} parent=1 // pred_region
      %s25 = ssub.s32 6144, 6144
      %26 = vsyncadd [#allocation6], %s25
      %s27 = sshll.u32 [#allocation5], 4
      %s28 = int_to_ptr.vmem [resolvable:$true] %s27
      %33 = dma.hbm_to_vmem [thread:$0]  %s1, 6144, %s28, [#allocation6], 384, 384, 24
    $region9: #{tpu_custom_call.1} parent=1 // pred_fallthru
      _
    // Predicated region
    $region10: #{tpu_custom_call.1} parent=1 // pred_check
      _
    $region11: #{tpu_custom_call.1} parent=1 // pred_check_branch
      %35 = sbr.rel (0) target = $region13
    $region12: #{tpu_custom_call.1} parent=1 // pred_region
      %36 = dma.done [#allocation3], 4096
    $region13: #{tpu_custom_call.1} parent=1 // pred_fallthru
      _
    // Predicated region
    $region14: #{tpu_custom_call.1} parent=1 // pred_check
      _
    $region15: #{tpu_custom_call.1} parent=1 // pred_check_branch
      %38 = sbr.rel (0) target = $region17
    $region16: #{tpu_custom_call.1} parent=1 // pred_region
      %39 = dma.done [#allocation6], 6144
    $region17: #{tpu_custom_call.1} parent=1 // pred_fallthru
      _
    %v40 = vld [vmem:[#allocation2] sm:$0xff]
    %v41 = vld [vmem:[#allocation2 + $0x8] sm:$0xff]
    %v42 = vld [vmem:[#allocation2 + $0x10] sm:$0xff]
    %v43 = vld [vmem:[#allocation2 + $0x18] sm:$0xff]
    %v44 = vld [vmem:[#allocation2 + $0x20] sm:$0xff]
    %v45 = vld [vmem:[#allocation2 + $0x28] sm:$0xff]
    %v46 = vld [vmem:[#allocation2 + $0x30] sm:$0xff]
    %v47 = vld [vmem:[#allocation2 + $0x38] sm:$0xff]
    %v48 = vld [vmem:[#allocation2 + $0x40] sm:$0xff]
    %v49 = vld [vmem:[#allocation2 + $0x48] sm:$0xff]
    %v50 = vld [vmem:[#allocation2 + $0x50] sm:$0xff]
    %v51 = vld [vmem:[#allocation2 + $0x58] sm:$0xff]
    %v52 = vld [vmem:[#allocation2 + $0x60] sm:$0xff]
    %v53 = vld [vmem:[#allocation2 + $0x68] sm:$0xff]
    %v54 = vld [vmem:[#allocation2 + $0x70] sm:$0xff]
    %v55 = vld [vmem:[#allocation2 + $0x78] sm:$0xff]
    %v56 = vld [vmem:[#allocation2 + $0x80] sm:$0xff]
    %v57 = vld [vmem:[#allocation2 + $0x88] sm:$0xff]
    %v58 = vld [vmem:[#allocation2 + $0x90] sm:$0xff]
    %v59 = vld [vmem:[#allocation2 + $0x98] sm:$0xff]
    %v60 = vld [vmem:[#allocation2 + $0xa0] sm:$0xff]
    %v61 = vld [vmem:[#allocation2 + $0xa8] sm:$0xff]
    %v62 = vld [vmem:[#allocation2 + $0xb0] sm:$0xff]
    %v63 = vld [vmem:[#allocation2 + $0xb8] sm:$0xff]
    %v64 = vld [vmem:[#allocation2 + $0xc0] sm:$0xff]
    %v65 = vld [vmem:[#allocation2 + $0xc8] sm:$0xff]
    %v66 = vld [vmem:[#allocation2 + $0xd0] sm:$0xff]
    %v67 = vld [vmem:[#allocation2 + $0xd8] sm:$0xff]
    %v68 = vld [vmem:[#allocation2 + $0xe0] sm:$0xff]
    %v69 = vld [vmem:[#allocation2 + $0xe8] sm:$0xff]
    %v70 = vld [vmem:[#allocation2 + $0xf0] sm:$0xff]
    %v71 = vld [vmem:[#allocation2 + $0xf8] sm:$0xff]
    %v72 = vld [vmem:[#allocation5] sm:$0xff]
    %v73 = vld [vmem:[#allocation5 + $0x8] sm:$0xff]
    %v74 = vld [vmem:[#allocation5 + $0x10] sm:$0xff]
    %v75 = vld [vmem:[#allocation5 + $0x18] sm:$0xff]
    %v76 = vld [vmem:[#allocation5 + $0x20] sm:$0xff]
    %v77 = vld [vmem:[#allocation5 + $0x28] sm:$0xff]
    %v78 = vld [vmem:[#allocation5 + $0x30] sm:$0xff]
    %v79 = vld [vmem:[#allocation5 + $0x38] sm:$0xff]
    %v80 = vld [vmem:[#allocation5 + $0x40] sm:$0xff]
    %v81 = vld [vmem:[#allocation5 + $0x48] sm:$0xff]
    %v82 = vld [vmem:[#allocation5 + $0x50] sm:$0xff]
    %v83 = vld [vmem:[#allocation5 + $0x58] sm:$0xff]
    %v84 = vld [vmem:[#allocation5 + $0x60] sm:$0xff]
    %v85 = vld [vmem:[#allocation5 + $0x68] sm:$0xff]
    %v86 = vld [vmem:[#allocation5 + $0x70] sm:$0xff]
    %v87 = vld [vmem:[#allocation5 + $0x78] sm:$0xff]
    %v88 = vld [vmem:[#allocation5 + $0x80] sm:$0xff]
    %v89 = vld [vmem:[#allocation5 + $0x88] sm:$0xff]
    %v90 = vld [vmem:[#allocation5 + $0x90] sm:$0xff]
    %v91 = vld [vmem:[#allocation5 + $0x98] sm:$0xff]
    %v92 = vld [vmem:[#allocation5 + $0xa0] sm:$0xff]
    %v93 = vld [vmem:[#allocation5 + $0xa8] sm:$0xff]
    %v94 = vld [vmem:[#allocation5 + $0xb0] sm:$0xff]
    %v95 = vld [vmem:[#allocation5 + $0xb8] sm:$0xff]
    %v96 = vld [vmem:[#allocation5 + $0xc0] sm:$0xff]
    %v97 = vld [vmem:[#allocation5 + $0xc8] sm:$0xff]
    %v98 = vld [vmem:[#allocation5 + $0xd0] sm:$0xff]
    %v99 = vld [vmem:[#allocation5 + $0xd8] sm:$0xff]
    %v100 = vld [vmem:[#allocation5 + $0xe0] sm:$0xff]
    %v101 = vld [vmem:[#allocation5 + $0xe8] sm:$0xff]
    %v102 = vld [vmem:[#allocation5 + $0xf0] sm:$0xff]
    %v103 = vld [vmem:[#allocation5 + $0xf8] sm:$0xff]
    %v104 = vld [vmem:[#allocation5 + $0x100] sm:$0xff]
    %v105 = vld [vmem:[#allocation5 + $0x108] sm:$0xff]
    %v106 = vld [vmem:[#allocation5 + $0x110] sm:$0xff]
    %v107 = vld [vmem:[#allocation5 + $0x118] sm:$0xff]
    %v108 = vld [vmem:[#allocation5 + $0x120] sm:$0xff]
    %v109 = vld [vmem:[#allocation5 + $0x128] sm:$0xff]
    %v110 = vld [vmem:[#allocation5 + $0x130] sm:$0xff]
    %v111 = vld [vmem:[#allocation5 + $0x138] sm:$0xff]
    %v112 = vld [vmem:[#allocation5 + $0x140] sm:$0xff]
    %v113 = vld [vmem:[#allocation5 + $0x148] sm:$0xff]
    %v114 = vld [vmem:[#allocation5 + $0x150] sm:$0xff]
    %v115 = vld [vmem:[#allocation5 + $0x158] sm:$0xff]
    %v116 = vld [vmem:[#allocation5 + $0x160] sm:$0xff]
    %v117 = vld [vmem:[#allocation5 + $0x168] sm:$0xff]
    %v118 = vld [vmem:[#allocation5 + $0x170] sm:$0xff]
    %v119 = vld [vmem:[#allocation5 + $0x178] sm:$0xff]
    %120 = vmatprep.subr.mxu0 %v118
    %121 = vmatpush1.msra.mxu0 %v117
    %122 = vmatprep.subr.mxu0 %v115
    %123 = vmatpush1.msra.mxu0 %v114
    %124 = vmatprep.subr.mxu0 %v112
    %125 = vmatpush1.msra.mxu0 %v111
    %126 = vmatprep.subr.mxu0 %v109
    %127 = vmatpush1.msra.mxu0 %v108
    %128 = vmatprep.subr.mxu0 %v106
    %129 = vmatpush1.msra.mxu0 %v105
    %130 = vmatprep.subr.mxu0 %v103
    %131 = vmatpush1.msra.mxu0 %v102
    %132 = vmatprep.subr.mxu0 %v100
    %133 = vmatpush1.msra.mxu0 %v99
    %134 = vmatprep.subr.mxu0 %v97
    %135 = vmatpush1.msra.mxu0 %v96
    %136 = vmatprep.subr.mxu0 %v94
    %137 = vmatpush1.msra.mxu0 %v93
    %138 = vmatprep.subr.mxu0 %v91
    %139 = vmatpush1.msra.mxu0 %v90
    %140 = vmatprep.subr.mxu0 %v88
    %141 = vmatpush1.msra.mxu0 %v87
    %142 = vmatprep.subr.mxu0 %v85
    %143 = vmatpush1.msra.mxu0 %v84
    %144 = vmatprep.subr.mxu0 %v82
    %145 = vmatpush1.msra.mxu0 %v81
    %146 = vmatprep.subr.mxu0 %v79
    %147 = vmatpush1.msra.mxu0 %v78
    %148 = vmatprep.subr.mxu0 %v76
    %149 = vmatpush1.msra.mxu0 %v75
    %150 = vmatprep.subr.mxu0 %v73
    %151 = vmatpush1.msra.mxu0 %v72
    %152 = vmatprep.subr.mxu0 0.0
    %153 = vmatpush2.msra.mxu0 0.0
    %154 = vmatprep.subr.mxu0 0.0
    %155 = vmatpush2.msra.mxu0 0.0
    %156 = vmatprep.subr.mxu0 0.0
    %157 = vmatpush2.msra.mxu0 0.0
    %158 = vmatprep.subr.mxu0 0.0
    %159 = vmatpush2.msra.mxu0 0.0
    %160 = vmatprep.subr.mxu0 0.0
    %161 = vmatpush2.msra.mxu0 0.0
    %162 = vmatprep.subr.mxu0 0.0
    %163 = vmatpush2.msra.mxu0 0.0
    %164 = vmatprep.subr.mxu0 0.0
    %165 = vmatpush2.msra.mxu0 0.0
    %166 = vmatprep.subr.mxu0 0.0
    %167 = vmatpush2.msra.mxu0 0.0
    %168 = vmatprep.subr.mxu0 0.0
    %169 = vmatpush2.msra.mxu0 0.0
    %170 = vmatprep.subr.mxu0 0.0
    %171 = vmatpush2.msra.mxu0 0.0
    %172 = vmatprep.subr.mxu0 0.0
    %173 = vmatpush2.msra.mxu0 0.0
    %174 = vmatprep.subr.mxu0 0.0
    %175 = vmatpush2.msra.mxu0 0.0
    %176 = vmatprep.subr.mxu0 0.0
    %177 = vmatpush2.msra.mxu0 0.0
    %178 = vmatprep.subr.mxu0 0.0
    %179 = vmatpush2.msra.mxu0 0.0
    %180 = vmatprep.subr.mxu0 0.0
    %181 = vmatpush2.msra.mxu0 0.0
    %182 = vmatprep.subr.mxu0 0.0
    %183 = vmatpush2.msra.mxu0 0.0
    %184 = vmatprep.mubr.f32.mxu0 0.0
    %185 = vmatmul.mubr.f32.gmra.mxu0 %v40
    %v186 = vpop.f32.mrf.mxu0
    %v187 = vadd.f32 0.0, %v186
    %v188 = vpop.f32.mrf.mxu0
    %v189 = vadd.f32 0.0, %v188
    %190 = vmatprep.mubr.f32.mxu0 0.0
    %191 = vmatmul.mubr.f32.gmra.mxu0 %v41
    %v192 = vpop.f32.mrf.mxu0
    %v193 = vadd.f32 0.0, %v192
    %v194 = vpop.f32.mrf.mxu0
    %v195 = vadd.f32 0.0, %v194
    %196 = vmatprep.mubr.f32.mxu0 0.0
    %197 = vmatmul.mubr.f32.gmra.mxu0 %v42
    %v198 = vpop.f32.mrf.mxu0
    %v199 = vadd.f32 0.0, %v198
    %v200 = vpop.f32.mrf.mxu0
    %v201 = vadd.f32 0.0, %v200
    %202 = vmatprep.mubr.f32.mxu0 0.0
    %203 = vmatmul.mubr.f32.gmra.mxu0 %v43
    %v204 = vpop.f32.mrf.mxu0
    %v205 = vadd.f32 0.0, %v204
    %v206 = vpop.f32.mrf.mxu0
    %v207 = vadd.f32 0.0, %v206
    %208 = vmatprep.mubr.f32.mxu0 0.0
    %209 = vmatmul.mubr.f32.gmra.mxu0 %v44
    %v210 = vpop.f32.mrf.mxu0
    %v211 = vadd.f32 0.0, %v210
    %v212 = vpop.f32.mrf.mxu0
    %v213 = vadd.f32 0.0, %v212
    %214 = vmatprep.mubr.f32.mxu0 0.0
    %215 = vmatmul.mubr.f32.gmra.mxu0 %v45
    %v216 = vpop.f32.mrf.mxu0
    %v217 = vadd.f32 0.0, %v216
    %v218 = vpop.f32.mrf.mxu0
    %v219 = vadd.f32 0.0, %v218
    %220 = vmatprep.mubr.f32.mxu0 0.0
    %221 = vmatmul.mubr.f32.gmra.mxu0 %v46
    %v222 = vpop.f32.mrf.mxu0
    %v223 = vadd.f32 0.0, %v222
    %v224 = vpop.f32.mrf.mxu0
    %v225 = vadd.f32 0.0, %v224
    %226 = vmatprep.mubr.f32.mxu0 0.0
    %227 = vmatmul.mubr.f32.gmra.mxu0 %v47
    %v228 = vpop.f32.mrf.mxu0
    %v229 = vadd.f32 0.0, %v228
    %v230 = vpop.f32.mrf.mxu0
    %v231 = vadd.f32 0.0, %v230
    %232 = vmatprep.mubr.f32.mxu0 0.0
    %233 = vmatmul.mubr.f32.gmra.mxu0 %v48
    %v234 = vpop.f32.mrf.mxu0
    %v235 = vadd.f32 0.0, %v234
    %v236 = vpop.f32.mrf.mxu0
    %v237 = vadd.f32 0.0, %v236
    %238 = vmatprep.mubr.f32.mxu0 0.0
    %239 = vmatmul.mubr.f32.gmra.mxu0 %v49
    %v240 = vpop.f32.mrf.mxu0
    %v241 = vadd.f32 0.0, %v240
    %v242 = vpop.f32.mrf.mxu0
    %v243 = vadd.f32 0.0, %v242
    %244 = vmatprep.mubr.f32.mxu0 0.0
    %245 = vmatmul.mubr.f32.gmra.mxu0 %v50
    %v246 = vpop.f32.mrf.mxu0
    %v247 = vadd.f32 0.0, %v246
    %v248 = vpop.f32.mrf.mxu0
    %v249 = vadd.f32 0.0, %v248
    %250 = vmatprep.mubr.f32.mxu0 0.0
    %251 = vmatmul.mubr.f32.gmra.mxu0 %v51
    %v252 = vpop.f32.mrf.mxu0
    %v253 = vadd.f32 0.0, %v252
    %v254 = vpop.f32.mrf.mxu0
    %v255 = vadd.f32 0.0, %v254
    %256 = vmatprep.mubr.f32.mxu0 0.0
    %257 = vmatmul.mubr.f32.gmra.mxu0 %v52
    %v258 = vpop.f32.mrf.mxu0
    %v259 = vadd.f32 0.0, %v258
    %v260 = vpop.f32.mrf.mxu0
    %v261 = vadd.f32 0.0, %v260
    %262 = vmatprep.mubr.f32.mxu0 0.0
    %263 = vmatmul.mubr.f32.gmra.mxu0 %v53
    %v264 = vpop.f32.mrf.mxu0
    %v265 = vadd.f32 0.0, %v264
    %v266 = vpop.f32.mrf.mxu0
    %v267 = vadd.f32 0.0, %v266
    %268 = vmatprep.mubr.f32.mxu0 0.0
    %269 = vmatmul.mubr.f32.gmra.mxu0 %v54
    %v270 = vpop.f32.mrf.mxu0
    %v271 = vadd.f32 0.0, %v270
    %v272 = vpop.f32.mrf.mxu0
    %v273 = vadd.f32 0.0, %v272
    %274 = vmatprep.mubr.f32.mxu0 0.0
    %275 = vmatmul.mubr.f32.gmra.mxu0 %v55
    %v276 = vpop.f32.mrf.mxu0
    %v277 = vadd.f32 0.0, %v276
    %v278 = vpop.f32.mrf.mxu0
    %v279 = vadd.f32 0.0, %v278
    %280 = vmatprep.mubr.f32.mxu0 0.0
    %281 = vmatmul.mubr.f32.gmra.mxu0 %v56
    %v282 = vpop.f32.mrf.mxu0
    %v283 = vadd.f32 0.0, %v282
    %v284 = vpop.f32.mrf.mxu0
    %v285 = vadd.f32 0.0, %v284
    %286 = vmatprep.mubr.f32.mxu0 0.0
    %287 = vmatmul.mubr.f32.gmra.mxu0 %v57
    %v288 = vpop.f32.mrf.mxu0
    %v289 = vadd.f32 0.0, %v288
    %v290 = vpop.f32.mrf.mxu0
    %v291 = vadd.f32 0.0, %v290
    %292 = vmatprep.mubr.f32.mxu0 0.0
    %293 = vmatmul.mubr.f32.gmra.mxu0 %v58
    %v294 = vpop.f32.mrf.mxu0
    %v295 = vadd.f32 0.0, %v294
    %v296 = vpop.f32.mrf.mxu0
    %v297 = vadd.f32 0.0, %v296
    %298 = vmatprep.mubr.f32.mxu0 0.0
    %299 = vmatmul.mubr.f32.gmra.mxu0 %v59
    %v300 = vpop.f32.mrf.mxu0
    %v301 = vadd.f32 0.0, %v300
    %v302 = vpop.f32.mrf.mxu0
    %v303 = vadd.f32 0.0, %v302
    %304 = vmatprep.mubr.f32.mxu0 0.0
    %305 = vmatmul.mubr.f32.gmra.mxu0 %v60
    %v306 = vpop.f32.mrf.mxu0
    %v307 = vadd.f32 0.0, %v306
    %v308 = vpop.f32.mrf.mxu0
    %v309 = vadd.f32 0.0, %v308
    %310 = vmatprep.mubr.f32.mxu0 0.0
    %311 = vmatmul.mubr.f32.gmra.mxu0 %v61
    %v312 = vpop.f32.mrf.mxu0
    %v313 = vadd.f32 0.0, %v312
    %v314 = vpop.f32.mrf.mxu0
    %v315 = vadd.f32 0.0, %v314
    %316 = vmatprep.mubr.f32.mxu0 0.0
    %317 = vmatmul.mubr.f32.gmra.mxu0 %v62
    %v318 = vpop.f32.mrf.mxu0
    %v319 = vadd.f32 0.0, %v318
    %v320 = vpop.f32.mrf.mxu0
    %v321 = vadd.f32 0.0, %v320
    %322 = vmatprep.mubr.f32.mxu0 0.0
    %323 = vmatmul.mubr.f32.gmra.mxu0 %v63
    %v324 = vpop.f32.mrf.mxu0
    %v325 = vadd.f32 0.0, %v324
    %v326 = vpop.f32.mrf.mxu0
    %v327 = vadd.f32 0.0, %v326
    %328 = vmatprep.mubr.f32.mxu0 0.0
    %329 = vmatmul.mubr.f32.gmra.mxu0 %v64
    %v330 = vpop.f32.mrf.mxu0
    %v331 = vadd.f32 0.0, %v330
    %v332 = vpop.f32.mrf.mxu0
    %v333 = vadd.f32 0.0, %v332
    %334 = vmatprep.mubr.f32.mxu0 0.0
    %335 = vmatmul.mubr.f32.gmra.mxu0 %v65
    %v336 = vpop.f32.mrf.mxu0
    %v337 = vadd.f32 0.0, %v336
    %v338 = vpop.f32.mrf.mxu0
    %v339 = vadd.f32 0.0, %v338
    %340 = vmatprep.mubr.f32.mxu0 0.0
    %341 = vmatmul.mubr.f32.gmra.mxu0 %v66
    %v342 = vpop.f32.mrf.mxu0
    %v343 = vadd.f32 0.0, %v342
    %v344 = vpop.f32.mrf.mxu0
    %v345 = vadd.f32 0.0, %v344
    %346 = vmatprep.mubr.f32.mxu0 0.0
    %347 = vmatmul.mubr.f32.gmra.mxu0 %v67
    %v348 = vpop.f32.mrf.mxu0
    %v349 = vadd.f32 0.0, %v348
    %v350 = vpop.f32.mrf.mxu0
    %v351 = vadd.f32 0.0, %v350
    %352 = vmatprep.mubr.f32.mxu0 0.0
    %353 = vmatmul.mubr.f32.gmra.mxu0 %v68
    %v354 = vpop.f32.mrf.mxu0
    %v355 = vadd.f32 0.0, %v354
    %v356 = vpop.f32.mrf.mxu0
    %v357 = vadd.f32 0.0, %v356
    %358 = vmatprep.mubr.f32.mxu0 0.0
    %359 = vmatmul.mubr.f32.gmra.mxu0 %v69
    %v360 = vpop.f32.mrf.mxu0
    %v361 = vadd.f32 0.0, %v360
    %v362 = vpop.f32.mrf.mxu0
    %v363 = vadd.f32 0.0, %v362
    %364 = vmatprep.mubr.f32.mxu0 0.0
    %365 = vmatmul.mubr.f32.gmra.mxu0 %v70
    %v366 = vpop.f32.mrf.mxu0
    %v367 = vadd.f32 0.0, %v366
    %v368 = vpop.f32.mrf.mxu0
    %v369 = vadd.f32 0.0, %v368
    %370 = vmatprep.mubr.f32.mxu0 0.0
    %371 = vmatmul.mubr.f32.gmra.mxu0 %v71
    %v372 = vpop.f32.mrf.mxu0
    %v373 = vadd.f32 0.0, %v372
    %v374 = vpop.f32.mrf.mxu0
    %v375 = vadd.f32 0.0, %v374
    %376 = vdwg.mxu0
    %377 = vmatprep.subr.mxu0 0.0
    %378 = vmatpush1.msra.mxu0 %v119
    %379 = vmatprep.subr.mxu0 0.0
    %380 = vmatpush1.msra.mxu0 %v116
    %381 = vmatprep.subr.mxu0 0.0
    %382 = vmatpush1.msra.mxu0 %v113
    %383 = vmatprep.subr.mxu0 0.0
    %384 = vmatpush1.msra.mxu0 %v110
    %385 = vmatprep.subr.mxu0 0.0
    %386 = vmatpush1.msra.mxu0 %v107
    %387 = vmatprep.subr.mxu0 0.0
    %388 = vmatpush1.msra.mxu0 %v104
    %389 = vmatprep.subr.mxu0 0.0
    %390 = vmatpush1.msra.mxu0 %v101
    %391 = vmatprep.subr.mxu0 0.0
    %392 = vmatpush1.msra.mxu0 %v98
    %393 = vmatprep.subr.mxu0 0.0
    %394 = vmatpush1.msra.mxu0 %v95
    %395 = vmatprep.subr.mxu0 0.0
    %396 = vmatpush1.msra.mxu0 %v92
    %397 = vmatprep.subr.mxu0 0.0
    %398 = vmatpush1.msra.mxu0 %v89
    %399 = vmatprep.subr.mxu0 0.0
    %400 = vmatpush1.msra.mxu0 %v86
    %401 = vmatprep.subr.mxu0 0.0
    %402 = vmatpush1.msra.mxu0 %v83
    %403 = vmatprep.subr.mxu0 0.0
    %404 = vmatpush1.msra.mxu0 %v80
    %405 = vmatprep.subr.mxu0 0.0
    %406 = vmatpush1.msra.mxu0 %v77
    %407 = vmatprep.subr.mxu0 0.0
    %408 = vmatpush1.msra.mxu0 %v74
    %409 = vmatprep.subr.mxu0 0.0
    %410 = vmatpush2.msra.mxu0 0.0
    %411 = vmatprep.subr.mxu0 0.0
    %412 = vmatpush2.msra.mxu0 0.0
    %413 = vmatprep.subr.mxu0 0.0
    %414 = vmatpush2.msra.mxu0 0.0
    %415 = vmatprep.subr.mxu0 0.0
    %416 = vmatpush2.msra.mxu0 0.0
    %417 = vmatprep.subr.mxu0 0.0
    %418 = vmatpush2.msra.mxu0 0.0
    %419 = vmatprep.subr.mxu0 0.0
    %420 = vmatpush2.msra.mxu0 0.0
    %421 = vmatprep.subr.mxu0 0.0
    %422 = vmatpush2.msra.mxu0 0.0
    %423 = vmatprep.subr.mxu0 0.0
    %424 = vmatpush2.msra.mxu0 0.0
    %425 = vmatprep.subr.mxu0 0.0
    %426 = vmatpush2.msra.mxu0 0.0
    %427 = vmatprep.subr.mxu0 0.0
    %428 = vmatpush2.msra.mxu0 0.0
    %429 = vmatprep.subr.mxu0 0.0
    %430 = vmatpush2.msra.mxu0 0.0
    %431 = vmatprep.subr.mxu0 0.0
    %432 = vmatpush2.msra.mxu0 0.0
    %433 = vmatprep.subr.mxu0 0.0
    %434 = vmatpush2.msra.mxu0 0.0
    %435 = vmatprep.subr.mxu0 0.0
    %436 = vmatpush2.msra.mxu0 0.0
    %437 = vmatprep.subr.mxu0 0.0
    %438 = vmatpush2.msra.mxu0 0.0
    %439 = vmatprep.subr.mxu0 0.0
    %440 = vmatpush2.msra.mxu0 0.0
    %441 = vmatprep.mubr.f32.mxu0 0.0
    %442 = vmatmul.mubr.f32.gmra.mxu0 %v40
    %v443 = vpop.f32.mrf.mxu0
    %v444 = vadd.f32 0.0, %v443
    %v445 = vpop.f32.mrf.mxu0
    %446 = vmatprep.mubr.f32.mxu0 0.0
    %447 = vmatmul.mubr.f32.gmra.mxu0 %v41
    %v448 = vpop.f32.mrf.mxu0
    %v449 = vadd.f32 0.0, %v448
    %v450 = vpop.f32.mrf.mxu0
    %451 = vmatprep.mubr.f32.mxu0 0.0
    %452 = vmatmul.mubr.f32.gmra.mxu0 %v42
    %v453 = vpop.f32.mrf.mxu0
    %v454 = vadd.f32 0.0, %v453
    %v455 = vpop.f32.mrf.mxu0
    %456 = vmatprep.mubr.f32.mxu0 0.0
    %457 = vmatmul.mubr.f32.gmra.mxu0 %v43
    %v458 = vpop.f32.mrf.mxu0
    %v459 = vadd.f32 0.0, %v458
    %v460 = vpop.f32.mrf.mxu0
    %461 = vmatprep.mubr.f32.mxu0 0.0
    %462 = vmatmul.mubr.f32.gmra.mxu0 %v44
    %v463 = vpop.f32.mrf.mxu0
    %v464 = vadd.f32 0.0, %v463
    %v465 = vpop.f32.mrf.mxu0
    %466 = vmatprep.mubr.f32.mxu0 0.0
    %467 = vmatmul.mubr.f32.gmra.mxu0 %v45
    %v468 = vpop.f32.mrf.mxu0
    %v469 = vadd.f32 0.0, %v468
    %v470 = vpop.f32.mrf.mxu0
    %471 = vmatprep.mubr.f32.mxu0 0.0
    %472 = vmatmul.mubr.f32.gmra.mxu0 %v46
    %v473 = vpop.f32.mrf.mxu0
    %v474 = vadd.f32 0.0, %v473
    %v475 = vpop.f32.mrf.mxu0
    %476 = vmatprep.mubr.f32.mxu0 0.0
    %477 = vmatmul.mubr.f32.gmra.mxu0 %v47
    %v478 = vpop.f32.mrf.mxu0
    %v479 = vadd.f32 0.0, %v478
    %v480 = vpop.f32.mrf.mxu0
    %481 = vmatprep.mubr.f32.mxu0 0.0
    %482 = vmatmul.mubr.f32.gmra.mxu0 %v48
    %v483 = vpop.f32.mrf.mxu0
    %v484 = vadd.f32 0.0, %v483
    %v485 = vpop.f32.mrf.mxu0
    %486 = vmatprep.mubr.f32.mxu0 0.0
    %487 = vmatmul.mubr.f32.gmra.mxu0 %v49
    %v488 = vpop.f32.mrf.mxu0
    %v489 = vadd.f32 0.0, %v488
    %v490 = vpop.f32.mrf.mxu0
    %491 = vmatprep.mubr.f32.mxu0 0.0
    %492 = vmatmul.mubr.f32.gmra.mxu0 %v50
    %v493 = vpop.f32.mrf.mxu0
    %v494 = vadd.f32 0.0, %v493
    %v495 = vpop.f32.mrf.mxu0
    %496 = vmatprep.mubr.f32.mxu0 0.0
    %497 = vmatmul.mubr.f32.gmra.mxu0 %v51
    %v498 = vpop.f32.mrf.mxu0
    %v499 = vadd.f32 0.0, %v498
    %v500 = vpop.f32.mrf.mxu0
    %501 = vmatprep.mubr.f32.mxu0 0.0
    %502 = vmatmul.mubr.f32.gmra.mxu0 %v52
    %v503 = vpop.f32.mrf.mxu0
    %v504 = vadd.f32 0.0, %v503
    %v505 = vpop.f32.mrf.mxu0
    %506 = vmatprep.mubr.f32.mxu0 0.0
    %507 = vmatmul.mubr.f32.gmra.mxu0 %v53
    %v508 = vpop.f32.mrf.mxu0
    %v509 = vadd.f32 0.0, %v508
    %v510 = vpop.f32.mrf.mxu0
    %511 = vmatprep.mubr.f32.mxu0 0.0
    %512 = vmatmul.mubr.f32.gmra.mxu0 %v54
    %v513 = vpop.f32.mrf.mxu0
    %v514 = vadd.f32 0.0, %v513
    %v515 = vpop.f32.mrf.mxu0
    %516 = vmatprep.mubr.f32.mxu0 0.0
    %517 = vmatmul.mubr.f32.gmra.mxu0 %v55
    %v518 = vpop.f32.mrf.mxu0
    %v519 = vadd.f32 0.0, %v518
    %v520 = vpop.f32.mrf.mxu0
    %521 = vmatprep.mubr.f32.mxu0 0.0
    %522 = vmatmul.mubr.f32.gmra.mxu0 %v56
    %v523 = vpop.f32.mrf.mxu0
    %v524 = vadd.f32 0.0, %v523
    %v525 = vpop.f32.mrf.mxu0
    %526 = vmatprep.mubr.f32.mxu0 0.0
    %527 = vmatmul.mubr.f32.gmra.mxu0 %v57
    %v528 = vpop.f32.mrf.mxu0
    %v529 = vadd.f32 0.0, %v528
    %v530 = vpop.f32.mrf.mxu0
    %531 = vmatprep.mubr.f32.mxu0 0.0
    %532 = vmatmul.mubr.f32.gmra.mxu0 %v58
    %v533 = vpop.f32.mrf.mxu0
    %v534 = vadd.f32 0.0, %v533
    %v535 = vpop.f32.mrf.mxu0
    %536 = vmatprep.mubr.f32.mxu0 0.0
    %537 = vmatmul.mubr.f32.gmra.mxu0 %v59
    %v538 = vpop.f32.mrf.mxu0
    %v539 = vadd.f32 0.0, %v538
    %v540 = vpop.f32.mrf.mxu0
    %541 = vmatprep.mubr.f32.mxu0 0.0
    %542 = vmatmul.mubr.f32.gmra.mxu0 %v60
    %v543 = vpop.f32.mrf.mxu0
    %v544 = vadd.f32 0.0, %v543
    %v545 = vpop.f32.mrf.mxu0
    %546 = vmatprep.mubr.f32.mxu0 0.0
    %547 = vmatmul.mubr.f32.gmra.mxu0 %v61
    %v548 = vpop.f32.mrf.mxu0
    %v549 = vadd.f32 0.0, %v548
    %v550 = vpop.f32.mrf.mxu0
    %551 = vmatprep.mubr.f32.mxu0 0.0
    %552 = vmatmul.mubr.f32.gmra.mxu0 %v62
    %v553 = vpop.f32.mrf.mxu0
    %v554 = vadd.f32 0.0, %v553
    %v555 = vpop.f32.mrf.mxu0
    %556 = vmatprep.mubr.f32.mxu0 0.0
    %557 = vmatmul.mubr.f32.gmra.mxu0 %v63
    %v558 = vpop.f32.mrf.mxu0
    %v559 = vadd.f32 0.0, %v558
    %v560 = vpop.f32.mrf.mxu0
    %561 = vmatprep.mubr.f32.mxu0 0.0
    %562 = vmatmul.mubr.f32.gmra.mxu0 %v64
    %v563 = vpop.f32.mrf.mxu0
    %v564 = vadd.f32 0.0, %v563
    %v565 = vpop.f32.mrf.mxu0
    %566 = vmatprep.mubr.f32.mxu0 0.0
    %567 = vmatmul.mubr.f32.gmra.mxu0 %v65
    %v568 = vpop.f32.mrf.mxu0
    %v569 = vadd.f32 0.0, %v568
    %v570 = vpop.f32.mrf.mxu0
    %571 = vmatprep.mubr.f32.mxu0 0.0
    %572 = vmatmul.mubr.f32.gmra.mxu0 %v66
    %v573 = vpop.f32.mrf.mxu0
    %v574 = vadd.f32 0.0, %v573
    %v575 = vpop.f32.mrf.mxu0
    %576 = vmatprep.mubr.f32.mxu0 0.0
    %577 = vmatmul.mubr.f32.gmra.mxu0 %v67
    %v578 = vpop.f32.mrf.mxu0
    %v579 = vadd.f32 0.0, %v578
    %v580 = vpop.f32.mrf.mxu0
    %581 = vmatprep.mubr.f32.mxu0 0.0
    %582 = vmatmul.mubr.f32.gmra.mxu0 %v68
    %v583 = vpop.f32.mrf.mxu0
    %v584 = vadd.f32 0.0, %v583
    %v585 = vpop.f32.mrf.mxu0
    %586 = vmatprep.mubr.f32.mxu0 0.0
    %587 = vmatmul.mubr.f32.gmra.mxu0 %v69
    %v588 = vpop.f32.mrf.mxu0
    %v589 = vadd.f32 0.0, %v588
    %v590 = vpop.f32.mrf.mxu0
    %591 = vmatprep.mubr.f32.mxu0 0.0
    %592 = vmatmul.mubr.f32.gmra.mxu0 %v70
    %v593 = vpop.f32.mrf.mxu0
    %v594 = vadd.f32 0.0, %v593
    %v595 = vpop.f32.mrf.mxu0
    %596 = vmatprep.mubr.f32.mxu0 0.0
    %597 = vmatmul.mubr.f32.gmra.mxu0 %v71
    %v598 = vpop.f32.mrf.mxu0
    %v599 = vadd.f32 0.0, %v598
    %v600 = vpop.f32.mrf.mxu0
    %601 = vdwg.mxu0
    %602 = vst [vmem:[#allocation7] sm:$0xff] %v187
    %603 = vst [vmem:[#allocation7 + $0x8] sm:$0xff] %v189
    %604 = vst [vmem:[#allocation7 + $0x10] sm:$0xff] %v444
    %605 = vst [vmem:[#allocation7 + $0x18] sm:$0xff] %v193
    %606 = vst [vmem:[#allocation7 + $0x20] sm:$0xff] %v195
    %607 = vst [vmem:[#allocation7 + $0x28] sm:$0xff] %v449
    %608 = vst [vmem:[#allocation7 + $0x30] sm:$0xff] %v199
    %609 = vst [vmem:[#allocation7 + $0x38] sm:$0xff] %v201
    %610 = vst [vmem:[#allocation7 + $0x40] sm:$0xff] %v454
    %611 = vst [vmem:[#allocation7 + $0x48] sm:$0xff] %v205
    %612 = vst [vmem:[#allocation7 + $0x50] sm:$0xff] %v207
    %613 = vst [vmem:[#allocation7 + $0x58] sm:$0xff] %v459
    %614 = vst [vmem:[#allocation7 + $0x60] sm:$0xff] %v211
    %615 = vst [vmem:[#allocation7 + $0x68] sm:$0xff] %v213
    %616 = vst [vmem:[#allocation7 + $0x70] sm:$0xff] %v464
    %617 = vst [vmem:[#allocation7 + $0x78] sm:$0xff] %v217
    %618 = vst [vmem:[#allocation7 + $0x80] sm:$0xff] %v219
    %619 = vst [vmem:[#allocation7 + $0x88] sm:$0xff] %v469
    %620 = vst [vmem:[#allocation7 + $0x90] sm:$0xff] %v223
    %621 = vst [vmem:[#allocation7 + $0x98] sm:$0xff] %v225
    %622 = vst [vmem:[#allocation7 + $0xa0] sm:$0xff] %v474
    %623 = vst [vmem:[#allocation7 + $0xa8] sm:$0xff] %v229
    %624 = vst [vmem:[#allocation7 + $0xb0] sm:$0xff] %v231
    %625 = vst [vmem:[#allocation7 + $0xb8] sm:$0xff] %v479
    %626 = vst [vmem:[#allocation7 + $0xc0] sm:$0xff] %v235
    %627 = vst [vmem:[#allocation7 + $0xc8] sm:$0xff] %v237
    %628 = vst [vmem:[#allocation7 + $0xd0] sm:$0xff] %v484
    %629 = vst [vmem:[#allocation7 + $0xd8] sm:$0xff] %v241
    %630 = vst [vmem:[#allocation7 + $0xe0] sm:$0xff] %v243
    %631 = vst [vmem:[#allocation7 + $0xe8] sm:$0xff] %v489
    %632 = vst [vmem:[#allocation7 + $0xf0] sm:$0xff] %v247
    %633 = vst [vmem:[#allocation7 + $0xf8] sm:$0xff] %v249
    %634 = vst [vmem:[#allocation7 + $0x100] sm:$0xff] %v494
    %635 = vst [vmem:[#allocation7 + $0x108] sm:$0xff] %v253
    %636 = vst [vmem:[#allocation7 + $0x110] sm:$0xff] %v255
    %637 = vst [vmem:[#allocation7 + $0x118] sm:$0xff] %v499
    %638 = vst [vmem:[#allocation7 + $0x120] sm:$0xff] %v259
    %639 = vst [vmem:[#allocation7 + $0x128] sm:$0xff] %v261
    %640 = vst [vmem:[#allocation7 + $0x130] sm:$0xff] %v504
    %641 = vst [vmem:[#allocation7 + $0x138] sm:$0xff] %v265
    %642 = vst [vmem:[#allocation7 + $0x140] sm:$0xff] %v267
    %643 = vst [vmem:[#allocation7 + $0x148] sm:$0xff] %v509
    %644 = vst [vmem:[#allocation7 + $0x150] sm:$0xff] %v271
    %645 = vst [vmem:[#allocation7 + $0x158] sm:$0xff] %v273
    %646 = vst [vmem:[#allocation7 + $0x160] sm:$0xff] %v514
    %647 = vst [vmem:[#allocation7 + $0x168] sm:$0xff] %v277
    %648 = vst [vmem:[#allocation7 + $0x170] sm:$0xff] %v279
    %649 = vst [vmem:[#allocation7 + $0x178] sm:$0xff] %v519
    %650 = vst [vmem:[#allocation7 + $0x180] sm:$0xff] %v283
    %651 = vst [vmem:[#allocation7 + $0x188] sm:$0xff] %v285
    %652 = vst [vmem:[#allocation7 + $0x190] sm:$0xff] %v524
    %653 = vst [vmem:[#allocation7 + $0x198] sm:$0xff] %v289
    %654 = vst [vmem:[#allocation7 + $0x1a0] sm:$0xff] %v291
    %655 = vst [vmem:[#allocation7 + $0x1a8] sm:$0xff] %v529
    %656 = vst [vmem:[#allocation7 + $0x1b0] sm:$0xff] %v295
    %657 = vst [vmem:[#allocation7 + $0x1b8] sm:$0xff] %v297
    %658 = vst [vmem:[#allocation7 + $0x1c0] sm:$0xff] %v534
    %659 = vst [vmem:[#allocation7 + $0x1c8] sm:$0xff] %v301
    %660 = vst [vmem:[#allocation7 + $0x1d0] sm:$0xff] %v303
    %661 = vst [vmem:[#allocation7 + $0x1d8] sm:$0xff] %v539
    %662 = vst [vmem:[#allocation7 + $0x1e0] sm:$0xff] %v307
    %663 = vst [vmem:[#allocation7 + $0x1e8] sm:$0xff] %v309
    %664 = vst [vmem:[#allocation7 + $0x1f0] sm:$0xff] %v544
    %665 = vst [vmem:[#allocation7 + $0x1f8] sm:$0xff] %v313
    %666 = vst [vmem:[#allocation7 + $0x200] sm:$0xff] %v315
    %667 = vst [vmem:[#allocation7 + $0x208] sm:$0xff] %v549
    %668 = vst [vmem:[#allocation7 + $0x210] sm:$0xff] %v319
    %669 = vst [vmem:[#allocation7 + $0x218] sm:$0xff] %v321
    %670 = vst [vmem:[#allocation7 + $0x220] sm:$0xff] %v554
    %671 = vst [vmem:[#allocation7 + $0x228] sm:$0xff] %v325
    %672 = vst [vmem:[#allocation7 + $0x230] sm:$0xff] %v327
    %673 = vst [vmem:[#allocation7 + $0x238] sm:$0xff] %v559
    %674 = vst [vmem:[#allocation7 + $0x240] sm:$0xff] %v331
    %675 = vst [vmem:[#allocation7 + $0x248] sm:$0xff] %v333
    %676 = vst [vmem:[#allocation7 + $0x250] sm:$0xff] %v564
    %677 = vst [vmem:[#allocation7 + $0x258] sm:$0xff] %v337
    %678 = vst [vmem:[#allocation7 + $0x260] sm:$0xff] %v339
    %679 = vst [vmem:[#allocation7 + $0x268] sm:$0xff] %v569
    %680 = vst [vmem:[#allocation7 + $0x270] sm:$0xff] %v343
    %681 = vst [vmem:[#allocation7 + $0x278] sm:$0xff] %v345
    %682 = vst [vmem:[#allocation7 + $0x280] sm:$0xff] %v574
    %683 = vst [vmem:[#allocation7 + $0x288] sm:$0xff] %v349
    %684 = vst [vmem:[#allocation7 + $0x290] sm:$0xff] %v351
    %685 = vst [vmem:[#allocation7 + $0x298] sm:$0xff] %v579
    %686 = vst [vmem:[#allocation7 + $0x2a0] sm:$0xff] %v355
    %687 = vst [vmem:[#allocation7 + $0x2a8] sm:$0xff] %v357
    %688 = vst [vmem:[#allocation7 + $0x2b0] sm:$0xff] %v584
    %689 = vst [vmem:[#allocation7 + $0x2b8] sm:$0xff] %v361
    %690 = vst [vmem:[#allocation7 + $0x2c0] sm:$0xff] %v363
    %691 = vst [vmem:[#allocation7 + $0x2c8] sm:$0xff] %v589
    %692 = vst [vmem:[#allocation7 + $0x2d0] sm:$0xff] %v367
    %693 = vst [vmem:[#allocation7 + $0x2d8] sm:$0xff] %v369
    %694 = vst [vmem:[#allocation7 + $0x2e0] sm:$0xff] %v594
    %695 = vst [vmem:[#allocation7 + $0x2e8] sm:$0xff] %v373
    %696 = vst [vmem:[#allocation7 + $0x2f0] sm:$0xff] %v375
    %697 = vst [vmem:[#allocation7 + $0x2f8] sm:$0xff] %v599
    // Predicated region
    $region18: #{tpu_custom_call.1} parent=1 // pred_check
      _
    $region19: #{tpu_custom_call.1} parent=1 // pred_check_branch
      %699 = sbr.rel (0) target = $region21
    $region20: #{tpu_custom_call.1} parent=1 // pred_region
      %s701 = ssub.s32 12288, 12288
      %702 = vsyncadd [#allocation4], %s701
      %s703 = sshll.u32 [#allocation7], 4
      %s704 = int_to_ptr.vmem [resolvable:$true] %s703
      %709 = dma.vmem_to_hbm [thread:$0]  %s704, 12288, %s2, [#allocation4], 384, 384, 24
    $region21: #{tpu_custom_call.1} parent=1 // pred_fallthru
      _
    // Predicated region
    $region22: #{tpu_custom_call.1} parent=1 // pred_check
      _
    $region23: #{tpu_custom_call.1} parent=1 // pred_check_branch
      %711 = sbr.rel (0) target = $region25
    $region24: #{tpu_custom_call.1} parent=1 // pred_region
      %712 = dma.done [#allocation4], 12288
    $region25: #{tpu_custom_call.1} parent=1 // pred_fallthru
      _
    %713 = vsyncpa [#allocation3], 1
    %714 = vsyncpa [#allocation6], 1
    %715 = vsyncpa [#allocation4], 1

</llo_original>
